<compile_context>
chip_gen: v5e
topology: v5e:2x2
jax: 0.10.0
libtpu: 0.0.40
codegen_flags: <defaults>
</compile_context>

<pallas_src>
import jax
import jax.numpy as jnp
from jax.experimental import pallas as pl
from jax.experimental.pallas import tpu as pltpu

_HAS_BUFFERED = hasattr(pl, "Buffered")


def decoder_kernel(code_ref, w1_ref, b1_ref, w2_ref, b2_ref, out_ref):
    # relu on the (possibly bf16) input code -- max with 0 is exact, no rounding.
    x = jnp.maximum(code_ref[...], 0.0)
    # hidden layer: MXU matmul with f32 accumulation, bias + relu in f32 on the VPU.
    h = jnp.dot(x, w1_ref[...], preferred_element_type=jnp.float32) + b1_ref[...]
    h = jnp.maximum(h, 0.0)
    # output layer: downcast activations to the weight dtype for the MXU, accumulate in f32.
    y = jnp.dot(h.astype(w2_ref.dtype), w2_ref[...],
                preferred_element_type=jnp.float32) + b2_ref[...]
    out_ref[...] = jnp.maximum(y, 0.0).astype(out_ref.dtype)


def _round_up(x, m):
    return ((x + m - 1) // m) * m


def _weight_spec(shape):
    index_map = lambda i: (0, 0)
    if _HAS_BUFFERED:
        try:
            # Grid-invariant operand: single VMEM buffer (saves VMEM, esp. on v7x).
            return pl.BlockSpec(shape, index_map, pipeline_mode=pl.Buffered(1))
        except TypeError:
            pass
    return pl.BlockSpec(shape, index_map)


def decoder_forward(code, w1_t, b1, w2_t, b2, *, tile_b=None,
                    compute_dtype=jnp.bfloat16, return_padded=False):
    """code: (B, in_f); w1_t: (in_f, 256); b1: (1, 256); w2_t: (256, out_f); b2: (1, out_f)."""
    B, in_f = code.shape
    hidden = w1_t.shape[1]
    out_f = w2_t.shape[1]
    assert w1_t.shape[0] == in_f and w2_t.shape[0] == hidden
    assert b1.shape == (1, hidden) and b2.shape == (1, out_f)

    # --- lane-dense output stores: pad out_f to a 128 multiple only if needed ---
    LANE = 128
    out_f_p = _round_up(out_f, LANE)
    if out_f_p != out_f:
        w2_t = jnp.pad(w2_t, ((0, 0), (0, out_f_p - out_f)))
        b2 = jnp.pad(b2, ((0, 0), (0, out_f_p - out_f)))

    # --- bf16 MXU operands (f32 accumulation in-kernel); biases stay f32 ---
    if compute_dtype is not None:
        code = code.astype(compute_dtype)
        w1_t = w1_t.astype(compute_dtype)
        w2_t = w2_t.astype(compute_dtype)
    b1 = b1.astype(jnp.float32)
    b2 = b2.astype(jnp.float32)

    # --- batch tiling: no wrapper-side padding, Pallas masks the ragged last block ---
    if tile_b is None:
        if B <= 128:
            tile_b = _round_up(max(B, 1), 8)   # single sublane-aligned tile, no wasted rows
        elif B <= 1024:
            tile_b = 128                        # >=2 grid steps so both v7x TCs get work
        else:
            tile_b = 256                        # fatter tiles for v6e/v7x when B is large
    num_tiles = pl.cdiv(B, tile_b)

    code_bytes = jnp.dtype(code.dtype).itemsize
    w_bytes = jnp.dtype(w1_t.dtype).itemsize
    cost = pl.CostEstimate(
        flops=2 * B * (in_f * hidden + hidden * out_f_p),
        transcendentals=0,
        bytes_accessed=(B * in_f * code_bytes
                        + (in_f * hidden + hidden * out_f_p) * w_bytes
                        + (hidden + out_f_p) * 4
                        + B * out_f_p * 4),
    )

    # Explicit scoped-VMEM budget from the actual block footprint (headroom x2),
    # clamped so big tiles stay within v7x's 64 MiB physical VMEM.
    block_bytes = (2 * tile_b * in_f * code_bytes
                   + 2 * tile_b * out_f_p * 4
                   + (1 if _HAS_BUFFERED else 2)
                   * (in_f * hidden * w_bytes + hidden * 4
                      + hidden * out_f_p * w_bytes + out_f_p * 4))
    vmem_limit = min(max(2 * block_bytes, 32 << 20), 64 << 20)

    out_p = pl.pallas_call(
        decoder_kernel,
        out_shape=jax.ShapeDtypeStruct((B, out_f_p), jnp.float32),
        grid_spec=pltpu.PrefetchScalarGridSpec(
            num_scalar_prefetch=0,
            grid=(num_tiles,),
            in_specs=[
                pl.BlockSpec((tile_b, in_f), lambda i: (i, 0)),   # code tile (streams over batch)
                _weight_spec((in_f, hidden)),                     # W1^T (grid-invariant)
                _weight_spec((1, hidden)),                        # b1
                _weight_spec((hidden, out_f_p)),                  # W2^T (lane-padded if needed)
                _weight_spec((1, out_f_p)),                       # b2
            ],
            out_specs=pl.BlockSpec((tile_b, out_f_p), lambda i: (i, 0)),
        ),
        compiler_params=pltpu.CompilerParams(
            dimension_semantics=("parallel",),
            vmem_limit_bytes=vmem_limit),
        cost_estimate=cost,
    )(code, w1_t, b1, w2_t, b2)

    if return_padded or out_f_p == out_f:
        return out_p
    return out_p[:, :out_f]


def reference_forward(code, w1_t, b1, w2_t, b2):
    x = jnp.maximum(code, 0.0)
    h = jnp.maximum(x @ w1_t + b1, 0.0)
    return jnp.maximum(h @ w2_t + b2, 0.0)


if __name__ == "__main__":
    key = jax.random.PRNGKey(0)
    k_code, k_w1, k_b1, k_w2, k_b2 = jax.random.split(key, 5)

    batch = 16
    input_shape = 32     # latent code size
    hidden = 256         # fixed by the module
    output_shape = 64    # reconstructed feature size

    code = jax.random.normal(k_code, (batch, input_shape), dtype=jnp.float32)

    # PyTorch Linear stores W as (out, in); we pass W^T.
    w1 = jax.random.normal(k_w1, (hidden, input_shape), dtype=jnp.float32) * 0.05
    b1 = jax.random.normal(k_b1, (hidden,), dtype=jnp.float32) * 0.05
    w2 = jax.random.normal(k_w2, (output_shape, hidden), dtype=jnp.float32) * 0.05
    b2 = jax.random.normal(k_b2, (output_shape,), dtype=jnp.float32) * 0.05

    w1_t = w1.T                       # (in, 256)
    b1_2d = b1.reshape(1, hidden)     # (1, 256)
    w2_t = w2.T                       # (256, out)
    b2_2d = b2.reshape(1, output_shape)

    out = decoder_forward(code, w1_t, b1_2d, w2_t, b2_2d)
    out = jax.block_until_ready(out)

    ref = reference_forward(code, w1_t, b1_2d, w2_t, b2_2d)
    assert out.shape == (batch, output_shape)
    # bf16 MXU operands with f32 accumulation -> loosened tolerance vs the f32 reference.
    assert jnp.allclose(out, ref, atol=2e-2, rtol=2e-2), "mismatch vs reference"

    print("KERNEL_OK")
</pallas_src>

<mosaic_0001>
module attributes {stable_mosaic.version = 11 : i64} {
  func.func @decoder_kernel(%arg0: i32, %arg1: memref<16x32xbf16, #tpu.memory_space<vmem>>, %arg2: memref<32x256xbf16, #tpu.memory_space<vmem>>, %arg3: memref<1x256xf32, #tpu.memory_space<vmem>>, %arg4: memref<256x128xbf16, #tpu.memory_space<vmem>>, %arg5: memref<1x128xf32, #tpu.memory_space<vmem>>, %arg6: memref<16x128xf32, #tpu.memory_space<vmem>>) attributes {dimension_semantics = [#tpu.dimension_semantics<parallel>], iteration_bounds = array<i64: 1>, scalar_prefetch = 0 : i64, scratch_operands = 0 : i64, tpu.core_type = #tpu.core_type<tc>, window_params = [{transform_indices = @transform_0, window_bounds = array<i64: 16, 32>}, {pipeline_mode = #tpu.pipeline_mode<synchronous>, transform_indices = @transform_1, window_bounds = array<i64: 32, 256>}, {pipeline_mode = #tpu.pipeline_mode<synchronous>, transform_indices = @transform_2, window_bounds = array<i64: 1, 256>}, {pipeline_mode = #tpu.pipeline_mode<synchronous>, transform_indices = @transform_3, window_bounds = array<i64: 256, 128>}, {pipeline_mode = #tpu.pipeline_mode<synchronous>, transform_indices = @transform_4, window_bounds = array<i64: 1, 128>}, {transform_indices = @transform_5, window_bounds = array<i64: 16, 128>}]} {
    %c0 = arith.constant 0 : index
    %c0_0 = arith.constant 0 : index
    %0 = vector.load %arg1[%c0, %c0_0] : memref<16x32xbf16, #tpu.memory_space<vmem>>, vector<16x32xbf16>
    %cst = arith.constant 0.000000e+00 : bf16
    %1 = vector.broadcast %cst : bf16 to vector<16x32xbf16>
    %2 = arith.maximumf %0, %1 : vector<16x32xbf16>
    %c0_1 = arith.constant 0 : index
    %c0_2 = arith.constant 0 : index
    %3 = vector.load %arg2[%c0_1, %c0_2] : memref<32x256xbf16, #tpu.memory_space<vmem>>, vector<32x256xbf16>
    %cst_3 = arith.constant dense<0.000000e+00> : vector<16x256xf32>
    %4 = tpu.matmul %2, %3, %cst_3 {dimension_numbers = #tpu.dot_dimension_numbers<[1], [0], [0], [1], [0, 0, 1, 1], [], []>} : vector<16x32xbf16>, vector<32x256xbf16>, vector<16x256xf32> -> vector<16x256xf32>
    %c0_4 = arith.constant 0 : index
    %c0_5 = arith.constant 0 : index
    %5 = vector.load %arg3[%c0_4, %c0_5] : memref<1x256xf32, #tpu.memory_space<vmem>>, vector<1x256xf32>
    %6 = vector.broadcast %5 : vector<1x256xf32> to vector<16x256xf32>
    %7 = arith.addf %4, %6 : vector<16x256xf32>
    %cst_6 = arith.constant 0.000000e+00 : f32
    %8 = vector.broadcast %cst_6 : f32 to vector<16x256xf32>
    %9 = arith.maximumf %7, %8 : vector<16x256xf32>
    %10 = arith.truncf %9 : vector<16x256xf32> to vector<16x256xbf16>
    %c0_7 = arith.constant 0 : index
    %c0_8 = arith.constant 0 : index
    %11 = vector.load %arg4[%c0_7, %c0_8] : memref<256x128xbf16, #tpu.memory_space<vmem>>, vector<256x128xbf16>
    %cst_9 = arith.constant dense<0.000000e+00> : vector<16x128xf32>
    %12 = tpu.matmul %10, %11, %cst_9 {dimension_numbers = #tpu.dot_dimension_numbers<[1], [0], [0], [1], [0, 0, 1, 1], [], []>} : vector<16x256xbf16>, vector<256x128xbf16>, vector<16x128xf32> -> vector<16x128xf32>
    %c0_10 = arith.constant 0 : index
    %c0_11 = arith.constant 0 : index
    %13 = vector.load %arg5[%c0_10, %c0_11] : memref<1x128xf32, #tpu.memory_space<vmem>>, vector<1x128xf32>
    %14 = vector.broadcast %13 : vector<1x128xf32> to vector<16x128xf32>
    %15 = arith.addf %12, %14 : vector<16x128xf32>
    %cst_12 = arith.constant 0.000000e+00 : f32
    %16 = vector.broadcast %cst_12 : f32 to vector<16x128xf32>
    %17 = arith.maximumf %15, %16 : vector<16x128xf32>
    %c0_13 = arith.constant 0 : index
    %c0_14 = arith.constant 0 : index
    %18 = vector.load %arg6[%c0_13, %c0_14] : memref<16x128xf32, #tpu.memory_space<vmem>>, vector<16x128xf32>
    tpu.vector_store %arg6[%c0_13, %c0_14], %17 {strides = array<i32>} : memref<16x128xf32, #tpu.memory_space<vmem>>, vector<16x128xf32>,
    return
  }
  func.func @transform_0(%arg0: i32) -> (i32, i32) {
    %c0_i32 = arith.constant 0 : i32
    %c0_i32_0 = arith.constant 0 : i32
    return %arg0, %c0_i32 : i32, i32
  }
  func.func @transform_1(%arg0: i32) -> (i32, i32) {
    %c0_i32 = arith.constant 0 : i32
    %c0_i32_0 = arith.constant 0 : i32
    %c0_i32_1 = arith.constant 0 : i32
    return %c0_i32, %c0_i32_0 : i32, i32
  }
  func.func @transform_2(%arg0: i32) -> (i32, i32) {
    %c0_i32 = arith.constant 0 : i32
    %c0_i32_0 = arith.constant 0 : i32
    %c0_i32_1 = arith.constant 0 : i32
    return %c0_i32, %c0_i32_0 : i32, i32
  }
  func.func @transform_3(%arg0: i32) -> (i32, i32) {
    %c0_i32 = arith.constant 0 : i32
    %c0_i32_0 = arith.constant 0 : i32
    %c0_i32_1 = arith.constant 0 : i32
    return %c0_i32, %c0_i32_0 : i32, i32
  }
  func.func @transform_4(%arg0: i32) -> (i32, i32) {
    %c0_i32 = arith.constant 0 : i32
    %c0_i32_0 = arith.constant 0 : i32
    %c0_i32_1 = arith.constant 0 : i32
    return %c0_i32, %c0_i32_0 : i32, i32
  }
  func.func @transform_5(%arg0: i32) -> (i32, i32) {
    %c0_i32 = arith.constant 0 : i32
    %c0_i32_0 = arith.constant 0 : i32
    return %arg0, %c0_i32 : i32, i32
  }
}

</mosaic_0001>

<llo_original>
// kernel: tpu_custom_call.1
$region0: #{tpu_custom_call.1}
  #allocation0 [shape = 'u32[]', space=smem, size = 0x4, offset = 0x4, fixed_abs, tag = 'smem constant byte address 0x4 - core index']
  #allocation1 [shape = 'u32[72,128]{1,0:T(1,128)}', space=vmem, size = 0x9000, scoped, tag = 'internal scratch']
  %s0 = inlined_call_operand.hbm [shape: bf16[16,32], index: 0, kind: input, shape index: {}]
  %s1 = inlined_call_operand.hbm [shape: bf16[32,256], index: 1, kind: input, shape index: {}]
  %s2 = inlined_call_operand.hbm [shape: f32[1,256], index: 2, kind: input, shape index: {}]
  %s3 = inlined_call_operand.hbm [shape: bf16[256,128], index: 3, kind: input, shape index: {}]
  %s4 = inlined_call_operand.vmem [shape: f32[1,128], index: 4, kind: input, shape index: {}]
  %s5 = inlined_call_operand.hbm [shape: f32[16,128], index: 5, kind: output, shape index: {}]
  %s6 = sld [smem:[#allocation0]]
  $region46: #{tpu_custom_call.1} parent=0
    _
  %s8 = ssub.s32 1, %s6
  %s9 = scalar_select 0, %s8, %s6
  $region1: #{tpu_custom_call.1} parent=0
    #allocation2 [shape = 'u8[4096]{0}', space=vmem, size = 0x1000, scoped, tag = 'input window, operand 0, single buffered']
    #allocation3 [shape = 's32[1]{0}', space=sflag, size = 0x4, scoped, tag = 'scoped memory for tpu_custom_call.1']
    #allocation4 [shape = 's32[1]{0}', space=sflag, size = 0x4, scoped, tag = 'scoped memory for tpu_custom_call.1']
    #allocation5 [shape = 'u8[16384]{0}', space=vmem, size = 0x4000, scoped, tag = 'input window, operand 1, single buffered']
    #allocation6 [shape = 's32[1]{0}', space=sflag, size = 0x4, scoped, tag = 'scoped memory for tpu_custom_call.1']
    #allocation7 [shape = 'u8[1024]{0}', space=vmem, size = 0x400, scoped, tag = 'input window, operand 2, single buffered']
    #allocation8 [shape = 'u8[65536]{0}', space=vmem, size = 0x10000, scoped, tag = 'input window, operand 3, single buffered']
    #allocation9 [shape = 's32[1]{0}', space=sflag, size = 0x4, scoped, tag = 'scoped memory for tpu_custom_call.1']
    #allocation10 [shape = 'u8[8192]{0}', space=vmem, size = 0x2000, scoped, tag = 'output window, operand 0, single buffered']
    %10 = vsyncpa [#allocation3], 0
    %11 = vsyncpa [#allocation6], 0
    %12 = vsyncpa [#allocation9], 0
    %13 = vsyncpa [#allocation4], 0
    // Predicated region
    $region2: #{tpu_custom_call.1} parent=1 // pred_check
      _
    $region3: #{tpu_custom_call.1} parent=1 // pred_check_branch
      %15 = sbr.rel (0) target = $region5
    $region4: #{tpu_custom_call.1} parent=1 // pred_region
      %17 = vsyncadd [#allocation3], 0
      %s18 = sshll.u32 %s0, 4
      %s19 = int_to_ptr.hbm [resolvable:$true] %s18
      %s20 = sshll.u32 [#allocation2], 4
      %s21 = int_to_ptr.vmem [resolvable:$true] %s20
      %26 = dma.hbm_to_vmem [thread:$0]  %s19, 128, %s21, [#allocation3], 64, 64, 4
    $region5: #{tpu_custom_call.1} parent=1 // pred_fallthru
      _
    // Predicated region
    $region6: #{tpu_custom_call.1} parent=1 // pred_check
      _
    $region7: #{tpu_custom_call.1} parent=1 // pred_check_branch
      %28 = sbr.rel (0) target = $region9
    $region8: #{tpu_custom_call.1} parent=1 // pred_region
      %30 = vsyncadd [#allocation6], 0
      %s31 = sshll.u32 %s1, 4
      %s32 = int_to_ptr.hbm [resolvable:$true] %s31
      %s33 = sshll.u32 [#allocation5], 4
      %s34 = int_to_ptr.vmem [resolvable:$true] %s33
      %39 = dma.hbm_to_vmem [thread:$0]  %s32, 512, %s34, [#allocation6], 128, 128, 8
    $region9: #{tpu_custom_call.1} parent=1 // pred_fallthru
      _
    // Predicated region
    $region10: #{tpu_custom_call.1} parent=1 // pred_check
      _
    $region11: #{tpu_custom_call.1} parent=1 // pred_check_branch
      %41 = sbr.rel (0) target = $region13
    $region12: #{tpu_custom_call.1} parent=1 // pred_region
      %43 = vsyncadd [#allocation6], 0
      %s45 = sshll.u32 %s2, 4
      %s46 = int_to_ptr.hbm [resolvable:$true] %s45
      %s47 = sshll.u32 [#allocation7], 4
      %s48 = int_to_ptr.vmem [resolvable:$true] %s47
      %50 = dma.hbm_to_vmem [thread:$0]  %s46, 32, %s48, [#allocation6]
    $region13: #{tpu_custom_call.1} parent=1 // pred_fallthru
      _
    // Predicated region
    $region14: #{tpu_custom_call.1} parent=1 // pred_check
      _
    $region15: #{tpu_custom_call.1} parent=1 // pred_check_branch
      %52 = sbr.rel (0) target = $region17
    $region16: #{tpu_custom_call.1} parent=1 // pred_region
      %54 = vsyncadd [#allocation9], 0
      %s55 = sshll.u32 %s3, 4
      %s56 = int_to_ptr.hbm [resolvable:$true] %s55
      %s57 = sshll.u32 [#allocation8], 4
      %s58 = int_to_ptr.vmem [resolvable:$true] %s57
      %63 = dma.hbm_to_vmem [thread:$0]  %s56, 2048, %s58, [#allocation9], 64, 64, 4
    $region17: #{tpu_custom_call.1} parent=1 // pred_fallthru
      _
    // Predicated region
    $region18: #{tpu_custom_call.1} parent=1 // pred_check
      _
    $region19: #{tpu_custom_call.1} parent=1 // pred_check_branch
      %65 = sbr.rel (0) target = $region21
    $region20: #{tpu_custom_call.1} parent=1 // pred_region
      _
    $region21: #{tpu_custom_call.1} parent=1 // pred_fallthru
      _
    // Predicated region
    $region22: #{tpu_custom_call.1} parent=1 // pred_check
      _
    $region23: #{tpu_custom_call.1} parent=1 // pred_check_branch
      %67 = sbr.rel (0) target = $region25
    $region24: #{tpu_custom_call.1} parent=1 // pred_region
      %69 = dma.done [#allocation3], 128
    $region25: #{tpu_custom_call.1} parent=1 // pred_fallthru
      _
    // Predicated region
    $region26: #{tpu_custom_call.1} parent=1 // pred_check
      _
    $region27: #{tpu_custom_call.1} parent=1 // pred_check_branch
      %71 = sbr.rel (0) target = $region29
    $region28: #{tpu_custom_call.1} parent=1 // pred_region
      %73 = dma.done [#allocation6], 512
    $region29: #{tpu_custom_call.1} parent=1 // pred_fallthru
      _
    // Predicated region
    $region30: #{tpu_custom_call.1} parent=1 // pred_check
      _
    $region31: #{tpu_custom_call.1} parent=1 // pred_check_branch
      %75 = sbr.rel (0) target = $region33
    $region32: #{tpu_custom_call.1} parent=1 // pred_region
      %77 = dma.done [#allocation6], 32
    $region33: #{tpu_custom_call.1} parent=1 // pred_fallthru
      _
    // Predicated region
    $region34: #{tpu_custom_call.1} parent=1 // pred_check
      _
    $region35: #{tpu_custom_call.1} parent=1 // pred_check_branch
      %79 = sbr.rel (0) target = $region37
    $region36: #{tpu_custom_call.1} parent=1 // pred_region
      %81 = dma.done [#allocation9], 2048
    $region37: #{tpu_custom_call.1} parent=1 // pred_fallthru
      _
    %v83 = vld [vmem:[#allocation2] sm:$0xf]
    %v84 = vld [vmem:[#allocation2 + $0x4] sm:$0xf]
    %v85 = vunpack.c.l.bf16 %v83
    %v86 = vunpack.c.l.bf16 %v84
    %v87 = vmax.f32 %v85, 0.0
    %v88 = vmax.f32 %v86, 0.0
    %v89 = vpack.c.bf16 %v88, %v87
    %v90 = vld [vmem:[#allocation5] sm:$0xff]
    %v91 = vld [vmem:[#allocation5 + $0x8] sm:$0xff]
    %v92 = vld [vmem:[#allocation5 + $0x10] sm:$0xff]
    %v93 = vld [vmem:[#allocation5 + $0x18] sm:$0xff]
    %v94 = vld [vmem:[#allocation7] sm:$0x3]
    %v96 = vperm.slane %v94, 0
    %v97 = vperm.slane %v94, 1
    %v104 = vunpack.c.l.b16 %v90
    %v105 = vunpack.c.h.b16 %v90
    %v106 = vunpack.c.l.b16 %v91
    %v107 = vunpack.c.h.b16 %v91
    %v108 = vunpack.c.l.b16 %v92
    %v109 = vunpack.c.h.b16 %v92
    %v110 = vunpack.c.l.b16 %v93
    %v111 = vunpack.c.h.b16 %v93
    %v112 = vpack.c.b16 %v106, %v104
    %v113 = vpack.c.b16 %v107, %v105
    %v114 = vpack.c.b16 %v110, %v108
    %v115 = vpack.c.b16 %v111, %v109
    %vm120 = vcmask 261120
    %v122 = vsel %vm120, %v89, 0
    %124 = vmatpush.bf16.msra.mxu0 0
    %125 = vmatpush.bf16.msra.mxu0 0
    %126 = vmatpush.bf16.msra.mxu0 0
    %127 = vmatpush.bf16.msra.mxu0 0
    %128 = vmatpush.bf16.msra.mxu0 0
    %129 = vmatpush.bf16.msra.mxu0 0
    %130 = vmatpush.bf16.msra.mxu0 %v114
    %131 = vmatpush.bf16.msra.mxu0 %v112
    %132 = vmatmul.bf16.gmra.mxu0 %v122
    %v133 = vpop.f32.mrf.mxu0
    %v134 = vadd.f32 %v96, %v133
    %v135 = vpop.f32.mrf.mxu0
    %v136 = vadd.f32 %v96, %v135
    %137 = vdwg.mxu0
    %138 = vmatpush.bf16.msra.mxu0 0
    %139 = vmatpush.bf16.msra.mxu0 0
    %140 = vmatpush.bf16.msra.mxu0 0
    %141 = vmatpush.bf16.msra.mxu0 0
    %142 = vmatpush.bf16.msra.mxu0 0
    %143 = vmatpush.bf16.msra.mxu0 0
    %144 = vmatpush.bf16.msra.mxu0 %v115
    %145 = vmatpush.bf16.msra.mxu0 %v113
    %146 = vmatmul.bf16.gmra.mxu0 %v122
    %v147 = vpop.f32.mrf.mxu0
    %v148 = vadd.f32 %v97, %v147
    %v149 = vpop.f32.mrf.mxu0
    %v150 = vadd.f32 %v97, %v149
    %151 = vdwg.mxu0
    %v152 = vmax.f32 %v134, 0.0
    %v153 = vmax.f32 %v148, 0.0
    %v154 = vmax.f32 %v136, 0.0
    %v155 = vmax.f32 %v150, 0.0
    %v156 = vpack.c.bf16 %v154, %v152
    %v157 = vpack.c.bf16 %v155, %v153
    %v158 = vld [vmem:[#allocation8] sm:$0xf]
    %v159 = vld [vmem:[#allocation8 + $0x4] sm:$0xf]
    %v160 = vld [vmem:[#allocation8 + $0x8] sm:$0xf]
    %v161 = vld [vmem:[#allocation8 + $0xc] sm:$0xf]
    %v162 = vld [vmem:[#allocation8 + $0x10] sm:$0xf]
    %v163 = vld [vmem:[#allocation8 + $0x14] sm:$0xf]
    %v164 = vld [vmem:[#allocation8 + $0x18] sm:$0xf]
    %v165 = vld [vmem:[#allocation8 + $0x1c] sm:$0xf]
    %v166 = vld [vmem:[#allocation8 + $0x20] sm:$0xf]
    %v167 = vld [vmem:[#allocation8 + $0x24] sm:$0xf]
    %v168 = vld [vmem:[#allocation8 + $0x28] sm:$0xf]
    %v169 = vld [vmem:[#allocation8 + $0x2c] sm:$0xf]
    %v170 = vld [vmem:[#allocation8 + $0x30] sm:$0xf]
    %v171 = vld [vmem:[#allocation8 + $0x34] sm:$0xf]
    %v172 = vld [vmem:[#allocation8 + $0x38] sm:$0xf]
    %v173 = vld [vmem:[#allocation8 + $0x3c] sm:$0xf]
    %v174 = vld [vmem:[#allocation8 + $0x40] sm:$0xf]
    %v175 = vld [vmem:[#allocation8 + $0x44] sm:$0xf]
    %v176 = vld [vmem:[#allocation8 + $0x48] sm:$0xf]
    %v177 = vld [vmem:[#allocation8 + $0x4c] sm:$0xf]
    %v178 = vld [vmem:[#allocation8 + $0x50] sm:$0xf]
    %v179 = vld [vmem:[#allocation8 + $0x54] sm:$0xf]
    %v180 = vld [vmem:[#allocation8 + $0x58] sm:$0xf]
    %v181 = vld [vmem:[#allocation8 + $0x5c] sm:$0xf]
    %v182 = vld [vmem:[#allocation8 + $0x60] sm:$0xf]
    %v183 = vld [vmem:[#allocation8 + $0x64] sm:$0xf]
    %v184 = vld [vmem:[#allocation8 + $0x68] sm:$0xf]
    %v185 = vld [vmem:[#allocation8 + $0x6c] sm:$0xf]
    %v186 = vld [vmem:[#allocation8 + $0x70] sm:$0xf]
    %v187 = vld [vmem:[#allocation8 + $0x74] sm:$0xf]
    %v188 = vld [vmem:[#allocation8 + $0x78] sm:$0xf]
    %v189 = vld [vmem:[#allocation8 + $0x7c] sm:$0xf]
    %v190 = vld [vmem:[%s4] sm:$0x1]
    %v192 = vperm.slane %v190, 0
    %v226 = vunpack.c.l.b16 %v158
    %v227 = vunpack.c.l.b16 %v159
    %v228 = vunpack.c.l.b16 %v160
    %v229 = vunpack.c.l.b16 %v161
    %v230 = vunpack.c.l.b16 %v162
    %v231 = vunpack.c.l.b16 %v163
    %v232 = vunpack.c.l.b16 %v164
    %v233 = vunpack.c.l.b16 %v165
    %v234 = vunpack.c.l.b16 %v166
    %v235 = vunpack.c.l.b16 %v167
    %v236 = vunpack.c.l.b16 %v168
    %v237 = vunpack.c.l.b16 %v169
    %v238 = vunpack.c.l.b16 %v170
    %v239 = vunpack.c.l.b16 %v171
    %v240 = vunpack.c.l.b16 %v172
    %v241 = vunpack.c.l.b16 %v173
    %v242 = vunpack.c.l.b16 %v174
    %v243 = vunpack.c.l.b16 %v175
    %v244 = vunpack.c.l.b16 %v176
    %v245 = vunpack.c.l.b16 %v177
    %v246 = vunpack.c.l.b16 %v178
    %v247 = vunpack.c.l.b16 %v179
    %v248 = vunpack.c.l.b16 %v180
    %v249 = vunpack.c.l.b16 %v181
    %v250 = vunpack.c.l.b16 %v182
    %v251 = vunpack.c.l.b16 %v183
    %v252 = vunpack.c.l.b16 %v184
    %v253 = vunpack.c.l.b16 %v185
    %v254 = vunpack.c.l.b16 %v186
    %v255 = vunpack.c.l.b16 %v187
    %v256 = vunpack.c.l.b16 %v188
    %v257 = vunpack.c.l.b16 %v189
    %v258 = vpack.c.b16 %v227, %v226
    %v259 = vpack.c.b16 %v229, %v228
    %v260 = vpack.c.b16 %v231, %v230
    %v261 = vpack.c.b16 %v233, %v232
    %v262 = vpack.c.b16 %v235, %v234
    %v263 = vpack.c.b16 %v237, %v236
    %v264 = vpack.c.b16 %v239, %v238
    %v265 = vpack.c.b16 %v241, %v240
    %v266 = vpack.c.b16 %v243, %v242
    %v267 = vpack.c.b16 %v245, %v244
    %v268 = vpack.c.b16 %v247, %v246
    %v269 = vpack.c.b16 %v249, %v248
    %v270 = vpack.c.b16 %v251, %v250
    %v271 = vpack.c.b16 %v253, %v252
    %v272 = vpack.c.b16 %v255, %v254
    %v273 = vpack.c.b16 %v257, %v256
    %290 = vmatpush.bf16.msra.mxu0 %v265
    %291 = vmatpush.bf16.msra.mxu0 %v264
    %292 = vmatpush.bf16.msra.mxu0 %v263
    %293 = vmatpush.bf16.msra.mxu0 %v262
    %294 = vmatpush.bf16.msra.mxu0 %v261
    %295 = vmatpush.bf16.msra.mxu0 %v260
    %296 = vmatpush.bf16.msra.mxu0 %v259
    %297 = vmatpush.bf16.msra.mxu0 %v258
    %298 = vmatmul.bf16.gmra.mxu0 %v156
    %v299 = vpop.f32.mrf.mxu0
    %v300 = vadd.f32 %v192, %v299
    %v301 = vpop.f32.mrf.mxu0
    %v302 = vadd.f32 %v192, %v301
    %303 = vdwg.mxu0
    %304 = vmatpush.bf16.msra.mxu0 %v273
    %305 = vmatpush.bf16.msra.mxu0 %v272
    %306 = vmatpush.bf16.msra.mxu0 %v271
    %307 = vmatpush.bf16.msra.mxu0 %v270
    %308 = vmatpush.bf16.msra.mxu0 %v269
    %309 = vmatpush.bf16.msra.mxu0 %v268
    %310 = vmatpush.bf16.msra.mxu0 %v267
    %311 = vmatpush.bf16.msra.mxu0 %v266
    %312 = vmatmul.bf16.gmra.mxu0 %v157
    %v313 = vpop.f32.mrf.mxu0
    %v314 = vadd.f32 %v300, %v313
    %v315 = vpop.f32.mrf.mxu0
    %v316 = vadd.f32 %v302, %v315
    %317 = vdwg.mxu0
    %v318 = vmax.f32 %v314, 0.0
    %v319 = vmax.f32 %v316, 0.0
    %320 = vst [vmem:[#allocation10] sm:$0xff] %v318
    %321 = vst [vmem:[#allocation10 + $0x8] sm:$0xff] %v319
    // Predicated region
    $region38: #{tpu_custom_call.1} parent=1 // pred_check
      _
    $region39: #{tpu_custom_call.1} parent=1 // pred_check_branch
      %323 = sbr.rel (0) target = $region41
    $region40: #{tpu_custom_call.1} parent=1 // pred_region
      %325 = vsyncadd [#allocation4], 0
      %s326 = sshll.u32 [#allocation10], 4
      %s327 = int_to_ptr.vmem [resolvable:$true] %s326
      %s328 = sshll.u32 %s5, 4
      %s329 = int_to_ptr.hbm [resolvable:$true] %s328
      %334 = dma.vmem_to_hbm [thread:$0]  %s327, 256, %s329, [#allocation4], 128, 128, 8
    $region41: #{tpu_custom_call.1} parent=1 // pred_fallthru
      _
    // Predicated region
    $region42: #{tpu_custom_call.1} parent=1 // pred_check
      _
    $region43: #{tpu_custom_call.1} parent=1 // pred_check_branch
      %336 = sbr.rel (0) target = $region45
    $region44: #{tpu_custom_call.1} parent=1 // pred_region
      %338 = dma.done [#allocation4], 256
    $region45: #{tpu_custom_call.1} parent=1 // pred_fallthru
      _
    %339 = vsyncpa [#allocation3], 1
    %340 = vsyncpa [#allocation6], 1
    %341 = vsyncpa [#allocation9], 1
    %342 = vsyncpa [#allocation4], 1

</llo_original>
